<compile_context>
chip_gen: v5e
topology: v5e:2x2
jax: 0.10.0
libtpu: 0.0.40
codegen_flags: <defaults>
</compile_context>

<pallas_src>
import functools

import jax
import jax.numpy as jnp
from jax.experimental import pallas as pl
from jax.experimental.pallas import tpu as pltpu


def _conv_stats_kernel(p00_ref, p01_ref, p10_ref, p11_ref, w_ref,
                       y_ref, s1_ref, s2_ref, *, OH, OW, C, OC_pad):
    """One batch element: 9-tap implicit-GEMM conv + per-channel sum / sum-of-squares."""
    phases = (p00_ref, p01_ref, p10_ref, p11_ref)
    acc = jnp.zeros((OH * OW, OC_pad), jnp.float32)
    for dh in range(3):                              # fully unrolled: 9 MXU matmuls
        a, ph = dh // 2, dh % 2
        for dw in range(3):
            b, pw = dw // 2, dw % 2
            # unit-stride slice of the (dh%2, dw%2) phase array -- no strided loads needed
            xt = phases[2 * ph + pw][0, a:a + OH, b:b + OW, :]      # (OH, OW, C)
            xt = xt.reshape(OH * OW, C)
            acc = acc + jnp.dot(xt, w_ref[3 * dh + dw],
                                preferred_element_type=jnp.float32)
    y_ref[0] = acc.astype(y_ref.dtype)               # conv output (bias folded later)
    # streaming BatchNorm statistics (f32, computed from the exact accumulator)
    s1_ref[0] = jnp.sum(acc, axis=0, keepdims=True)
    s2_ref[0] = jnp.sum(acc * acc, axis=0, keepdims=True)


def _bn_lrelu_kernel(y_ref, scale_ref, shift_ref, o_ref):
    """Folded BN affine + LeakyReLU(0.01): one mul, one add, one select per element."""
    z = y_ref[0].astype(jnp.float32) * scale_ref[...] + shift_ref[...]
    o_ref[0] = jnp.where(z >= 0, z, 0.01 * z)


def conv_block(x_nchw, w_oihw, bias, gamma, beta, *, eps=1e-5,
               compute_dtype=jnp.bfloat16):
    """x_nchw: (N, C, H, W). Returns (N, OC, OH, OW), matching the PyTorch ConvBlock forward."""
    N, C, H, W = x_nchw.shape
    OC = w_oihw.shape[0]
    KH = KW = 3
    S = 2
    P = 1
    OH = (H + 2 * P - KH) // S + 1
    OW = (W + 2 * P - KW) // S + 1
    OHp, OWp = OH + 1, OW + 1              # phase-decimated spatial extents (incl. halo)
    Mimg = OH * OW                         # output rows per image
    OC_pad = ((OC + 127) // 128) * 128     # lane-dense output channels

    # ---- glue: layout only (one pass over the input; NO (M, 9C) im2col written to HBM) ----
    x_nhwc = jnp.transpose(x_nchw, (0, 2, 3, 1)).astype(compute_dtype)
    xp = jnp.pad(x_nhwc,
                 ((0, 0), (P, 2 * OHp - H - P), (P, 2 * OWp - W - P), (0, 0)))
    # 2x2 spatial phase split: tap (dh, dw) becomes a unit-stride slice of phase (dh%2, dw%2).
    p00 = xp[:, 0::2, 0::2, :]
    p01 = xp[:, 0::2, 1::2, :]
    p10 = xp[:, 1::2, 0::2, :]
    p11 = xp[:, 1::2, 1::2, :]             # each (N, OHp, OWp, C); total bytes == padded input

    # weights (OC, C, 3, 3) -> (9, C, OC_pad), zero-padded along OC (exact for the matmul)
    w_taps = jnp.transpose(w_oihw, (2, 3, 1, 0)).reshape(KH * KW, C, OC)
    w_taps = jnp.pad(w_taps, ((0, 0), (0, 0), (0, OC_pad - OC))).astype(compute_dtype)

    phase_spec = pl.BlockSpec((1, OHp, OWp, C), lambda n: (n, 0, 0, 0))
    kern1 = functools.partial(_conv_stats_kernel, OH=OH, OW=OW, C=C, OC_pad=OC_pad)

    y, s1, s2 = pl.pallas_call(
        kern1,
        out_shape=(
            jax.ShapeDtypeStruct((N, Mimg, OC_pad), compute_dtype),  # conv output stream
            jax.ShapeDtypeStruct((N, 1, OC_pad), jnp.float32),       # per-image sum
            jax.ShapeDtypeStruct((N, 1, OC_pad), jnp.float32),       # per-image sum of squares
        ),
        grid=(N,),
        in_specs=[phase_spec, phase_spec, phase_spec, phase_spec,
                  pl.BlockSpec((KH * KW, C, OC_pad), lambda n: (0, 0, 0))],
        out_specs=(
            pl.BlockSpec((1, Mimg, OC_pad), lambda n: (n, 0, 0)),
            pl.BlockSpec((1, 1, OC_pad), lambda n: (n, 0, 0)),
            pl.BlockSpec((1, 1, OC_pad), lambda n: (n, 0, 0)),
        ),
        compiler_params=pltpu.CompilerParams(
            dimension_semantics=("parallel",)),
    )(p00, p01, p10, p11, w_taps)

    # ---- finalize: per-channel scale/shift (O(OC) work; exact divisor = true element count) ----
    count = N * Mimg                        # no padded rows exist, so stats are uncontaminated
    mean = jnp.sum(s1, axis=(0, 1)) / count                        # mean of conv (no bias)
    var = jnp.maximum(jnp.sum(s2, axis=(0, 1)) / count - mean * mean, 0.0)
    bias_p = jnp.pad(bias.astype(jnp.float32), (0, OC_pad - OC))
    gamma_p = jnp.pad(gamma.astype(jnp.float32), (0, OC_pad - OC))   # padded ch: gamma=0
    beta_p = jnp.pad(beta.astype(jnp.float32), (0, OC_pad - OC))
    mean_yb = mean + bias_p                 # BN sees conv+bias; variance is bias-invariant
    scale = gamma_p * jax.lax.rsqrt(var + eps)
    shift = beta_p + scale * (bias_p - mean_yb)   # == beta - scale*mean (bias cancels exactly)

    out_pad = pl.pallas_call(
        _bn_lrelu_kernel,
        out_shape=jax.ShapeDtypeStruct((N, Mimg, OC_pad), jnp.float32),
        grid=(N,),
        in_specs=[
            pl.BlockSpec((1, Mimg, OC_pad), lambda n: (n, 0, 0)),
            pl.BlockSpec((1, OC_pad), lambda n: (0, 0)),
            pl.BlockSpec((1, OC_pad), lambda n: (0, 0)),
        ],
        out_specs=pl.BlockSpec((1, Mimg, OC_pad), lambda n: (n, 0, 0)),
        compiler_params=pltpu.CompilerParams(
            dimension_semantics=("parallel",)),
    )(y, scale.reshape(1, OC_pad), shift.reshape(1, OC_pad))

    # slice padded channels off BEFORE the NCHW transpose, then restore layout
    out = out_pad[:, :, :OC].reshape(N, OH, OW, OC)
    return jnp.transpose(out, (0, 3, 1, 2)).astype(x_nchw.dtype)


def _reference(x_nchw, w_oihw, bias, gamma, beta):
    """Pure-JAX reference mirroring the PyTorch forward (training-mode BN, f32)."""
    y = jax.lax.conv_general_dilated(
        x_nchw, w_oihw, window_strides=(2, 2), padding=((1, 1), (1, 1)),
        dimension_numbers=("NCHW", "OIHW", "NCHW"),
        precision=jax.lax.Precision.HIGHEST)
    y = y + bias[None, :, None, None]
    mean = jnp.mean(y, axis=(0, 2, 3), keepdims=True)
    var = jnp.mean((y - mean) ** 2, axis=(0, 2, 3), keepdims=True)
    y_hat = (y - mean) * jax.lax.rsqrt(var + 1e-5)
    z = gamma[None, :, None, None] * y_hat + beta[None, :, None, None]
    return jnp.where(z >= 0, z, 0.01 * z)


if __name__ == "__main__":
    key = jax.random.PRNGKey(0)
    k_x, k_w, k_b = jax.random.split(key, 3)

    N, C_in, H, W = 2, 4, 16, 16
    C_out = 8

    x = jax.random.normal(k_x, (N, C_in, H, W), dtype=jnp.float32)

    # Deterministic parameter init (Conv2d weight/bias; BN gamma=1, beta=0 as in PyTorch init).
    fan_in = C_in * 3 * 3
    w = jax.random.normal(k_w, (C_out, C_in, 3, 3), dtype=jnp.float32) * (1.0 / fan_in) ** 0.5
    b = jax.random.normal(k_b, (C_out,), dtype=jnp.float32) * 0.1
    gamma = jnp.ones((C_out,), dtype=jnp.float32)
    beta = jnp.zeros((C_out,), dtype=jnp.float32)

    ref = _reference(x, w, b, gamma, beta)

    # Exact-semantics path (f32 MXU inputs): tight tolerance vs the PyTorch-mirroring reference.
    out_f32 = jax.block_until_ready(
        conv_block(x, w, b, gamma, beta, compute_dtype=jnp.float32))
    assert out_f32.shape == (N, C_out, H // 2, W // 2), out_f32.shape
    assert jnp.allclose(out_f32, ref, rtol=1e-4, atol=1e-4), "f32 kernel mismatch vs reference"

    # Default fast path (bf16 MXU inputs, f32 accumulation). Looser tolerance accounts only
    # for bf16 rounding of the matmul inputs; the kernel structure is otherwise exact.
    out_bf16 = jax.block_until_ready(conv_block(x, w, b, gamma, beta))
    assert out_bf16.shape == (N, C_out, H // 2, W // 2), out_bf16.shape
    assert jnp.allclose(out_bf16, ref, rtol=3e-2, atol=3e-2), "bf16 kernel mismatch vs reference"

    print("KERNEL_OK")
</pallas_src>

<mosaic_0001>
module attributes {stable_mosaic.version = 11 : i64} {
  func.func @_conv_stats_kernel(%arg0: i32, %arg1: memref<1x9x9x4xf32, #tpu.memory_space<vmem>>, %arg2: memref<1x9x9x4xf32, #tpu.memory_space<vmem>>, %arg3: memref<1x9x9x4xf32, #tpu.memory_space<vmem>>, %arg4: memref<1x9x9x4xf32, #tpu.memory_space<vmem>>, %arg5: memref<9x4x128xf32, #tpu.memory_space<vmem>>, %arg6: memref<1x64x128xf32, #tpu.memory_space<vmem>>, %arg7: memref<1x1x128xf32, #tpu.memory_space<vmem>>, %arg8: memref<1x1x128xf32, #tpu.memory_space<vmem>>) attributes {dimension_semantics = [#tpu.dimension_semantics<parallel>], iteration_bounds = array<i64: 2>, scalar_prefetch = 0 : i64, scratch_operands = 0 : i64, tpu.core_type = #tpu.core_type<tc>, window_params = [{transform_indices = @transform_0, window_bounds = array<i64: 1, 9, 9, 4>}, {transform_indices = @transform_1, window_bounds = array<i64: 1, 9, 9, 4>}, {transform_indices = @transform_2, window_bounds = array<i64: 1, 9, 9, 4>}, {transform_indices = @transform_3, window_bounds = array<i64: 1, 9, 9, 4>}, {pipeline_mode = #tpu.pipeline_mode<synchronous>, transform_indices = @transform_4, window_bounds = array<i64: 9, 4, 128>}, {transform_indices = @transform_5, window_bounds = array<i64: 1, 64, 128>}, {transform_indices = @transform_6, window_bounds = array<i64: 1, 1, 128>}, {transform_indices = @transform_7, window_bounds = array<i64: 1, 1, 128>}]} {
    %cst = arith.constant 0.000000e+00 : f32
    %0 = vector.broadcast %cst : f32 to vector<64x128xf32>
    %c0 = arith.constant 0 : index
    %c0_0 = arith.constant 0 : index
    %c0_1 = arith.constant 0 : index
    %c0_2 = arith.constant 0 : index
    %1 = vector.load %arg1[%c0, %c0_0, %c0_1, %c0_2] : memref<1x9x9x4xf32, #tpu.memory_space<vmem>>, vector<1x8x8x4xf32>
    %2 = vector.shape_cast %1 : vector<1x8x8x4xf32> to vector<8x8x4xf32>
    %3 = vector.shape_cast %2 : vector<8x8x4xf32> to vector<64x4xf32>
    %c0_3 = arith.constant 0 : index
    %c0_4 = arith.constant 0 : index
    %c0_5 = arith.constant 0 : index
    %4 = vector.load %arg5[%c0_3, %c0_4, %c0_5] : memref<9x4x128xf32, #tpu.memory_space<vmem>>, vector<1x4x128xf32>
    %5 = vector.shape_cast %4 : vector<1x4x128xf32> to vector<4x128xf32>
    %cst_6 = arith.constant dense<0.000000e+00> : vector<64x128xf32>
    %6 = tpu.matmul %3, %5, %cst_6 {dimension_numbers = #tpu.dot_dimension_numbers<[1], [0], [0], [1], [0, 0, 1, 1], [], []>} : vector<64x4xf32>, vector<4x128xf32>, vector<64x128xf32> -> vector<64x128xf32>
    %7 = arith.addf %0, %6 : vector<64x128xf32>
    %c0_7 = arith.constant 0 : index
    %c0_8 = arith.constant 0 : index
    %c0_9 = arith.constant 0 : index
    %c0_10 = arith.constant 0 : index
    %8 = vector.load %arg2[%c0_7, %c0_8, %c0_9, %c0_10] : memref<1x9x9x4xf32, #tpu.memory_space<vmem>>, vector<1x8x8x4xf32>
    %9 = vector.shape_cast %8 : vector<1x8x8x4xf32> to vector<8x8x4xf32>
    %10 = vector.shape_cast %9 : vector<8x8x4xf32> to vector<64x4xf32>
    %c1 = arith.constant 1 : index
    %c0_11 = arith.constant 0 : index
    %c0_12 = arith.constant 0 : index
    %11 = vector.load %arg5[%c1, %c0_11, %c0_12] : memref<9x4x128xf32, #tpu.memory_space<vmem>>, vector<1x4x128xf32>
    %12 = vector.shape_cast %11 : vector<1x4x128xf32> to vector<4x128xf32>
    %cst_13 = arith.constant dense<0.000000e+00> : vector<64x128xf32>
    %13 = tpu.matmul %10, %12, %cst_13 {dimension_numbers = #tpu.dot_dimension_numbers<[1], [0], [0], [1], [0, 0, 1, 1], [], []>} : vector<64x4xf32>, vector<4x128xf32>, vector<64x128xf32> -> vector<64x128xf32>
    %14 = arith.addf %7, %13 : vector<64x128xf32>
    %c0_14 = arith.constant 0 : index
    %c0_15 = arith.constant 0 : index
    %c1_16 = arith.constant 1 : index
    %c0_17 = arith.constant 0 : index
    %15 = vector.load %arg1[%c0_14, %c0_15, %c1_16, %c0_17] : memref<1x9x9x4xf32, #tpu.memory_space<vmem>>, vector<1x8x8x4xf32>
    %16 = vector.shape_cast %15 : vector<1x8x8x4xf32> to vector<8x8x4xf32>
    %17 = vector.shape_cast %16 : vector<8x8x4xf32> to vector<64x4xf32>
    %c2 = arith.constant 2 : index
    %c0_18 = arith.constant 0 : index
    %c0_19 = arith.constant 0 : index
    %18 = vector.load %arg5[%c2, %c0_18, %c0_19] : memref<9x4x128xf32, #tpu.memory_space<vmem>>, vector<1x4x128xf32>
    %19 = vector.shape_cast %18 : vector<1x4x128xf32> to vector<4x128xf32>
    %cst_20 = arith.constant dense<0.000000e+00> : vector<64x128xf32>
    %20 = tpu.matmul %17, %19, %cst_20 {dimension_numbers = #tpu.dot_dimension_numbers<[1], [0], [0], [1], [0, 0, 1, 1], [], []>} : vector<64x4xf32>, vector<4x128xf32>, vector<64x128xf32> -> vector<64x128xf32>
    %21 = arith.addf %14, %20 : vector<64x128xf32>
    %c0_21 = arith.constant 0 : index
    %c0_22 = arith.constant 0 : index
    %c0_23 = arith.constant 0 : index
    %c0_24 = arith.constant 0 : index
    %22 = vector.load %arg3[%c0_21, %c0_22, %c0_23, %c0_24] : memref<1x9x9x4xf32, #tpu.memory_space<vmem>>, vector<1x8x8x4xf32>
    %23 = vector.shape_cast %22 : vector<1x8x8x4xf32> to vector<8x8x4xf32>
    %24 = vector.shape_cast %23 : vector<8x8x4xf32> to vector<64x4xf32>
    %c3 = arith.constant 3 : index
    %c0_25 = arith.constant 0 : index
    %c0_26 = arith.constant 0 : index
    %25 = vector.load %arg5[%c3, %c0_25, %c0_26] : memref<9x4x128xf32, #tpu.memory_space<vmem>>, vector<1x4x128xf32>
    %26 = vector.shape_cast %25 : vector<1x4x128xf32> to vector<4x128xf32>
    %cst_27 = arith.constant dense<0.000000e+00> : vector<64x128xf32>
    %27 = tpu.matmul %24, %26, %cst_27 {dimension_numbers = #tpu.dot_dimension_numbers<[1], [0], [0], [1], [0, 0, 1, 1], [], []>} : vector<64x4xf32>, vector<4x128xf32>, vector<64x128xf32> -> vector<64x128xf32>
    %28 = arith.addf %21, %27 : vector<64x128xf32>
    %c0_28 = arith.constant 0 : index
    %c0_29 = arith.constant 0 : index
    %c0_30 = arith.constant 0 : index
    %c0_31 = arith.constant 0 : index
    %29 = vector.load %arg4[%c0_28, %c0_29, %c0_30, %c0_31] : memref<1x9x9x4xf32, #tpu.memory_space<vmem>>, vector<1x8x8x4xf32>
    %30 = vector.shape_cast %29 : vector<1x8x8x4xf32> to vector<8x8x4xf32>
    %31 = vector.shape_cast %30 : vector<8x8x4xf32> to vector<64x4xf32>
    %c4 = arith.constant 4 : index
    %c0_32 = arith.constant 0 : index
    %c0_33 = arith.constant 0 : index
    %32 = vector.load %arg5[%c4, %c0_32, %c0_33] : memref<9x4x128xf32, #tpu.memory_space<vmem>>, vector<1x4x128xf32>
    %33 = vector.shape_cast %32 : vector<1x4x128xf32> to vector<4x128xf32>
    %cst_34 = arith.constant dense<0.000000e+00> : vector<64x128xf32>
    %34 = tpu.matmul %31, %33, %cst_34 {dimension_numbers = #tpu.dot_dimension_numbers<[1], [0], [0], [1], [0, 0, 1, 1], [], []>} : vector<64x4xf32>, vector<4x128xf32>, vector<64x128xf32> -> vector<64x128xf32>
    %35 = arith.addf %28, %34 : vector<64x128xf32>
    %c0_35 = arith.constant 0 : index
    %c0_36 = arith.constant 0 : index
    %c1_37 = arith.constant 1 : index
    %c0_38 = arith.constant 0 : index
    %36 = vector.load %arg3[%c0_35, %c0_36, %c1_37, %c0_38] : memref<1x9x9x4xf32, #tpu.memory_space<vmem>>, vector<1x8x8x4xf32>
    %37 = vector.shape_cast %36 : vector<1x8x8x4xf32> to vector<8x8x4xf32>
    %38 = vector.shape_cast %37 : vector<8x8x4xf32> to vector<64x4xf32>
    %c5 = arith.constant 5 : index
    %c0_39 = arith.constant 0 : index
    %c0_40 = arith.constant 0 : index
    %39 = vector.load %arg5[%c5, %c0_39, %c0_40] : memref<9x4x128xf32, #tpu.memory_space<vmem>>, vector<1x4x128xf32>
    %40 = vector.shape_cast %39 : vector<1x4x128xf32> to vector<4x128xf32>
    %cst_41 = arith.constant dense<0.000000e+00> : vector<64x128xf32>
    %41 = tpu.matmul %38, %40, %cst_41 {dimension_numbers = #tpu.dot_dimension_numbers<[1], [0], [0], [1], [0, 0, 1, 1], [], []>} : vector<64x4xf32>, vector<4x128xf32>, vector<64x128xf32> -> vector<64x128xf32>
    %42 = arith.addf %35, %41 : vector<64x128xf32>
    %c0_42 = arith.constant 0 : index
    %c1_43 = arith.constant 1 : index
    %c0_44 = arith.constant 0 : index
    %c0_45 = arith.constant 0 : index
    %43 = vector.load %arg1[%c0_42, %c1_43, %c0_44, %c0_45] : memref<1x9x9x4xf32, #tpu.memory_space<vmem>>, vector<1x8x8x4xf32>
    %44 = vector.shape_cast %43 : vector<1x8x8x4xf32> to vector<8x8x4xf32>
    %45 = vector.shape_cast %44 : vector<8x8x4xf32> to vector<64x4xf32>
    %c6 = arith.constant 6 : index
    %c0_46 = arith.constant 0 : index
    %c0_47 = arith.constant 0 : index
    %46 = vector.load %arg5[%c6, %c0_46, %c0_47] : memref<9x4x128xf32, #tpu.memory_space<vmem>>, vector<1x4x128xf32>
    %47 = vector.shape_cast %46 : vector<1x4x128xf32> to vector<4x128xf32>
    %cst_48 = arith.constant dense<0.000000e+00> : vector<64x128xf32>
    %48 = tpu.matmul %45, %47, %cst_48 {dimension_numbers = #tpu.dot_dimension_numbers<[1], [0], [0], [1], [0, 0, 1, 1], [], []>} : vector<64x4xf32>, vector<4x128xf32>, vector<64x128xf32> -> vector<64x128xf32>
    %49 = arith.addf %42, %48 : vector<64x128xf32>
    %c0_49 = arith.constant 0 : index
    %c1_50 = arith.constant 1 : index
    %c0_51 = arith.constant 0 : index
    %c0_52 = arith.constant 0 : index
    %50 = vector.load %arg2[%c0_49, %c1_50, %c0_51, %c0_52] : memref<1x9x9x4xf32, #tpu.memory_space<vmem>>, vector<1x8x8x4xf32>
    %51 = vector.shape_cast %50 : vector<1x8x8x4xf32> to vector<8x8x4xf32>
    %52 = vector.shape_cast %51 : vector<8x8x4xf32> to vector<64x4xf32>
    %c7 = arith.constant 7 : index
    %c0_53 = arith.constant 0 : index
    %c0_54 = arith.constant 0 : index
    %53 = vector.load %arg5[%c7, %c0_53, %c0_54] : memref<9x4x128xf32, #tpu.memory_space<vmem>>, vector<1x4x128xf32>
    %54 = vector.shape_cast %53 : vector<1x4x128xf32> to vector<4x128xf32>
    %cst_55 = arith.constant dense<0.000000e+00> : vector<64x128xf32>
    %55 = tpu.matmul %52, %54, %cst_55 {dimension_numbers = #tpu.dot_dimension_numbers<[1], [0], [0], [1], [0, 0, 1, 1], [], []>} : vector<64x4xf32>, vector<4x128xf32>, vector<64x128xf32> -> vector<64x128xf32>
    %56 = arith.addf %49, %55 : vector<64x128xf32>
    %c0_56 = arith.constant 0 : index
    %c1_57 = arith.constant 1 : index
    %c1_58 = arith.constant 1 : index
    %c0_59 = arith.constant 0 : index
    %57 = vector.load %arg1[%c0_56, %c1_57, %c1_58, %c0_59] : memref<1x9x9x4xf32, #tpu.memory_space<vmem>>, vector<1x8x8x4xf32>
    %58 = vector.shape_cast %57 : vector<1x8x8x4xf32> to vector<8x8x4xf32>
    %59 = vector.shape_cast %58 : vector<8x8x4xf32> to vector<64x4xf32>
    %c8 = arith.constant 8 : index
    %c0_60 = arith.constant 0 : index
    %c0_61 = arith.constant 0 : index
    %60 = vector.load %arg5[%c8, %c0_60, %c0_61] : memref<9x4x128xf32, #tpu.memory_space<vmem>>, vector<1x4x128xf32>
    %61 = vector.shape_cast %60 : vector<1x4x128xf32> to vector<4x128xf32>
    %cst_62 = arith.constant dense<0.000000e+00> : vector<64x128xf32>
    %62 = tpu.matmul %59, %61, %cst_62 {dimension_numbers = #tpu.dot_dimension_numbers<[1], [0], [0], [1], [0, 0, 1, 1], [], []>} : vector<64x4xf32>, vector<4x128xf32>, vector<64x128xf32> -> vector<64x128xf32>
    %63 = arith.addf %56, %62 : vector<64x128xf32>
    %c0_63 = arith.constant 0 : index
    %c0_64 = arith.constant 0 : index
    %c0_65 = arith.constant 0 : index
    %64 = vector.load %arg6[%c0_63, %c0_64, %c0_65] : memref<1x64x128xf32, #tpu.memory_space<vmem>>, vector<1x64x128xf32>
    %65 = vector.shape_cast %64 : vector<1x64x128xf32> to vector<64x128xf32>
    %66 = vector.shape_cast %63 : vector<64x128xf32> to vector<1x64x128xf32>
    tpu.vector_store %arg6[%c0_63, %c0_64, %c0_65], %66 {strides = array<i32>} : memref<1x64x128xf32, #tpu.memory_space<vmem>>, vector<1x64x128xf32>,
    %cst_66 = arith.constant dense<0.000000e+00> : vector<128xf32>
    %67 = vector.multi_reduction <add>, %63, %cst_66 [0] : vector<64x128xf32> to vector<128xf32>
    %68 = vector.shape_cast %67 : vector<128xf32> to vector<1x128xf32>
    %c0_67 = arith.constant 0 : index
    %c0_68 = arith.constant 0 : index
    %c0_69 = arith.constant 0 : index
    %69 = vector.load %arg7[%c0_67, %c0_68, %c0_69] : memref<1x1x128xf32, #tpu.memory_space<vmem>>, vector<1x1x128xf32>
    %70 = vector.shape_cast %69 : vector<1x1x128xf32> to vector<1x128xf32>
    %71 = vector.shape_cast %68 : vector<1x128xf32> to vector<1x1x128xf32>
    tpu.vector_store %arg7[%c0_67, %c0_68, %c0_69], %71 {strides = array<i32>} : memref<1x1x128xf32, #tpu.memory_space<vmem>>, vector<1x1x128xf32>,
    %72 = arith.mulf %63, %63 : vector<64x128xf32>
    %cst_70 = arith.constant dense<0.000000e+00> : vector<128xf32>
    %73 = vector.multi_reduction <add>, %72, %cst_70 [0] : vector<64x128xf32> to vector<128xf32>
    %74 = vector.shape_cast %73 : vector<128xf32> to vector<1x128xf32>
    %c0_71 = arith.constant 0 : index
    %c0_72 = arith.constant 0 : index
    %c0_73 = arith.constant 0 : index
    %75 = vector.load %arg8[%c0_71, %c0_72, %c0_73] : memref<1x1x128xf32, #tpu.memory_space<vmem>>, vector<1x1x128xf32>
    %76 = vector.shape_cast %75 : vector<1x1x128xf32> to vector<1x128xf32>
    %77 = vector.shape_cast %74 : vector<1x128xf32> to vector<1x1x128xf32>
    tpu.vector_store %arg8[%c0_71, %c0_72, %c0_73], %77 {strides = array<i32>} : memref<1x1x128xf32, #tpu.memory_space<vmem>>, vector<1x1x128xf32>,
    return
  }
  func.func @transform_0(%arg0: i32) -> (i32, i32, i32, i32) {
    %c0_i32 = arith.constant 0 : i32
    %c0_i32_0 = arith.constant 0 : i32
    %c0_i32_1 = arith.constant 0 : i32
    %c0_i32_2 = arith.constant 0 : i32
    return %arg0, %c0_i32, %c0_i32_0, %c0_i32_1 : i32, i32, i32, i32
  }
  func.func @transform_1(%arg0: i32) -> (i32, i32, i32, i32) {
    %c0_i32 = arith.constant 0 : i32
    %c0_i32_0 = arith.constant 0 : i32
    %c0_i32_1 = arith.constant 0 : i32
    %c0_i32_2 = arith.constant 0 : i32
    return %arg0, %c0_i32, %c0_i32_0, %c0_i32_1 : i32, i32, i32, i32
  }
  func.func @transform_2(%arg0: i32) -> (i32, i32, i32, i32) {
    %c0_i32 = arith.constant 0 : i32
    %c0_i32_0 = arith.constant 0 : i32
    %c0_i32_1 = arith.constant 0 : i32
    %c0_i32_2 = arith.constant 0 : i32
    return %arg0, %c0_i32, %c0_i32_0, %c0_i32_1 : i32, i32, i32, i32
  }
  func.func @transform_3(%arg0: i32) -> (i32, i32, i32, i32) {
    %c0_i32 = arith.constant 0 : i32
    %c0_i32_0 = arith.constant 0 : i32
    %c0_i32_1 = arith.constant 0 : i32
    %c0_i32_2 = arith.constant 0 : i32
    return %arg0, %c0_i32, %c0_i32_0, %c0_i32_1 : i32, i32, i32, i32
  }
  func.func @transform_4(%arg0: i32) -> (i32, i32, i32) {
    %c0_i32 = arith.constant 0 : i32
    %c0_i32_0 = arith.constant 0 : i32
    %c0_i32_1 = arith.constant 0 : i32
    %c0_i32_2 = arith.constant 0 : i32
    return %c0_i32, %c0_i32_0, %c0_i32_1 : i32, i32, i32
  }
  func.func @transform_5(%arg0: i32) -> (i32, i32, i32) {
    %c0_i32 = arith.constant 0 : i32
    %c0_i32_0 = arith.constant 0 : i32
    %c0_i32_1 = arith.constant 0 : i32
    return %arg0, %c0_i32, %c0_i32_0 : i32, i32, i32
  }
  func.func @transform_6(%arg0: i32) -> (i32, i32, i32) {
    %c0_i32 = arith.constant 0 : i32
    %c0_i32_0 = arith.constant 0 : i32
    %c0_i32_1 = arith.constant 0 : i32
    return %arg0, %c0_i32, %c0_i32_0 : i32, i32, i32
  }
  func.func @transform_7(%arg0: i32) -> (i32, i32, i32) {
    %c0_i32 = arith.constant 0 : i32
    %c0_i32_0 = arith.constant 0 : i32
    %c0_i32_1 = arith.constant 0 : i32
    return %arg0, %c0_i32, %c0_i32_0 : i32, i32, i32
  }
}

</mosaic_0001>

<llo_original>
// kernel: tpu_custom_call.1
$region0: #{tpu_custom_call.1}
  #allocation0 [shape = 'u32[]', space=smem, size = 0x4, offset = 0x4, fixed_abs, tag = 'smem constant byte address 0x4 - core index']
  #allocation1 [shape = 'u32[72,128]{1,0:T(1,128)}', space=vmem, size = 0x9000, scoped, tag = 'internal scratch']
  %s0 = inlined_call_operand.vmem [shape: f32[2,9,9,4], index: 0, kind: input, shape index: {}]
  %s1 = inlined_call_operand.vmem [shape: f32[2,9,9,4], index: 1, kind: input, shape index: {}]
  %s2 = inlined_call_operand.vmem [shape: f32[2,9,9,4], index: 2, kind: input, shape index: {}]
  %s3 = inlined_call_operand.vmem [shape: f32[2,9,9,4], index: 3, kind: input, shape index: {}]
  %s4 = inlined_call_operand.vmem [shape: f32[9,4,128], index: 4, kind: input, shape index: {}]
  %s5 = inlined_call_operand.hbm [shape: f32[2,64,128], index: 5, kind: output, shape index: {0}]
  %s6 = inlined_call_operand.hbm [shape: f32[2,1,128], index: 6, kind: output, shape index: {1}]
  %s7 = inlined_call_operand.hbm [shape: f32[2,1,128], index: 7, kind: output, shape index: {2}]
  %8 = xla_tuple %s5, %s6, %s7
  %s9 = sld [smem:[#allocation0]]
  $region69: #{tpu_custom_call.1} parent=0
    _
  %s11 = ssub.s32 1, %s9
  %s12 = scalar_select 0, %s11, %s9
  $region1: #{tpu_custom_call.1} parent=0
    #allocation2 [shape = 'u8[65536]{0}', space=vmem, size = 0x10000, scoped, tag = 'output window, operand 0']
    #allocation3 [shape = 's32[2]{0}', space=sflag, size = 0x8, scoped, tag = 'scoped memory for tpu_custom_call.1']
    #allocation4 [shape = 'u8[1024]{0}', space=vmem, size = 0x400, scoped, tag = 'output window, operand 1']
    #allocation5 [shape = 's32[2]{0}', space=sflag, size = 0x8, scoped, tag = 'scoped memory for tpu_custom_call.1']
    #allocation6 [shape = 'u8[1024]{0}', space=vmem, size = 0x400, scoped, tag = 'output window, operand 2']
    %13 = vsyncpa [#allocation3], 0
    %s14 = scalar_lea.sflag [#allocation3], 1
    %15 = vsyncpa %s14, 0
    %16 = vsyncpa [#allocation5], 0
    %s17 = scalar_lea.sflag [#allocation5], 1
    %18 = vsyncpa %s17, 0
    loop: start=0, step=1, limit=4
    $region2: #{tpu_custom_call.1} parent=1 // loop_pre_header
      _
    $region3: #{tpu_custom_call.1} parent=1 // loop_header
      %s20 = sphi 0, %s24
      %p21 = scmp.ge.s32.totalorder %s20, 4
      %s30 = sphi 0, %s32
      %s33 = sphi 0, %s30
      %s34 = sphi 0, %s33
      %s50 = sphi 0, %s34
      %s56 = sphi 0, %s58
      %s59 = sphi 0, %s56
      %s60 = sphi 0, %s59
      %s76 = sphi 0, %s60
      %s82 = sphi 0, %s84
      %s85 = sphi 0, %s82
      %s86 = sphi 0, %s85
      %s102 = sphi 0, %s86
      %s108 = sphi 0, %s110
      %s111 = sphi 0, %s108
      %s112 = sphi 0, %s111
      %s128 = sphi 0, %s112
      %s132 = sphi 0, %s132
      %s134 = sphi 0, %s132
      %s135 = sphi 0, %s134
      %s149 = sphi 0, %s135
      %s155 = sphi 0, %s157
      %s158 = sphi 0, %s155
      %s159 = sphi 0, %s158
      %s175 = sphi 0, %s159
      %s181 = sphi 0, %s183
      %s184 = sphi 0, %s181
      %s185 = sphi 0, %s184
      %s201 = sphi 0, %s185
      %s207 = sphi 0, %s209
      %s210 = sphi 0, %s207
      %s211 = sphi 0, %s210
      %s227 = sphi 0, %s211
    $region4: #{tpu_custom_call.1} parent=1 // loop_header_branch
      %23 = sbr.rel (%p21) target = $region8
    $region5: #{tpu_custom_call.1} parent=1 // loop_body
      %s25 = ssub.s32 %s20, 1
      %s26 = ssub.s32 %s20, 2
      %s27 = sadd.s32 %s20, 1
      %s28 = ssub.s32 %s20, %s27
      %p29 = scmp.eq.s32.totalorder %s28, 0
      %s31 = sadd.s32 %s30, 1
      %s32 = scalar_select %p29, %s30, %s31
      %p35 = pneg %p29
      %p36 = scmp.eq.s32.totalorder %s20, 1
      %p37 = por %p35, %p36
      %p38 = scmp.ne.s32.totalorder %s30, %s33
      %p39 = scmp.eq.s32.totalorder %s20, 0
      %p40 = por %p38, %p39
      %p41 = scmp.ne.s32.totalorder %s30, %s33
      %p42 = scmp.eq.s32.totalorder %s25, 1
      %p43 = por %p41, %p42
      %p44 = scmp.ne.s32.totalorder %s33, %s34
      %p45 = scmp.eq.s32.totalorder %s25, 0
      %p46 = por %p44, %p45
      %p47 = scmp.ne.s32.totalorder %s33, %s34
      %p48 = scmp.eq.s32.totalorder %s26, 1
      %p49 = por %p47, %p48
      %p51 = scmp.ne.s32.totalorder %s34, %s50
      %p52 = scmp.eq.s32.totalorder %s26, 0
      %p53 = por %p51, %p52
      %s54 = ssub.s32 %s20, %s27
      %p55 = scmp.eq.s32.totalorder %s54, 0
      %s57 = sadd.s32 %s56, 1
      %s58 = scalar_select %p55, %s56, %s57
      %p61 = pneg %p55
      %p62 = scmp.eq.s32.totalorder %s20, 1
      %p63 = por %p61, %p62
      %p64 = scmp.ne.s32.totalorder %s56, %s59
      %p65 = scmp.eq.s32.totalorder %s20, 0
      %p66 = por %p64, %p65
      %p67 = scmp.ne.s32.totalorder %s56, %s59
      %p68 = scmp.eq.s32.totalorder %s25, 1
      %p69 = por %p67, %p68
      %p70 = scmp.ne.s32.totalorder %s59, %s60
      %p71 = scmp.eq.s32.totalorder %s25, 0
      %p72 = por %p70, %p71
      %p73 = scmp.ne.s32.totalorder %s59, %s60
      %p74 = scmp.eq.s32.totalorder %s26, 1
      %p75 = por %p73, %p74
      %p77 = scmp.ne.s32.totalorder %s60, %s76
      %p78 = scmp.eq.s32.totalorder %s26, 0
      %p79 = por %p77, %p78
      %s80 = ssub.s32 %s20, %s27
      %p81 = scmp.eq.s32.totalorder %s80, 0
      %s83 = sadd.s32 %s82, 1
      %s84 = scalar_select %p81, %s82, %s83
      %p87 = pneg %p81
      %p88 = scmp.eq.s32.totalorder %s20, 1
      %p89 = por %p87, %p88
      %p90 = scmp.ne.s32.totalorder %s82, %s85
      %p91 = scmp.eq.s32.totalorder %s20, 0
      %p92 = por %p90, %p91
      %p93 = scmp.ne.s32.totalorder %s82, %s85
      %p94 = scmp.eq.s32.totalorder %s25, 1
      %p95 = por %p93, %p94
      %p96 = scmp.ne.s32.totalorder %s85, %s86
      %p97 = scmp.eq.s32.totalorder %s25, 0
      %p98 = por %p96, %p97
      %p99 = scmp.ne.s32.totalorder %s85, %s86
      %p100 = scmp.eq.s32.totalorder %s26, 1
      %p101 = por %p99, %p100
      %p103 = scmp.ne.s32.totalorder %s86, %s102
      %p104 = scmp.eq.s32.totalorder %s26, 0
      %p105 = por %p103, %p104
      %s106 = ssub.s32 %s20, %s27
      %p107 = scmp.eq.s32.totalorder %s106, 0
      %s109 = sadd.s32 %s108, 1
      %s110 = scalar_select %p107, %s108, %s109
      %p113 = pneg %p107
      %p114 = scmp.eq.s32.totalorder %s20, 1
      %p115 = por %p113, %p114
      %p116 = scmp.ne.s32.totalorder %s108, %s111
      %p117 = scmp.eq.s32.totalorder %s20, 0
      %p118 = por %p116, %p117
      %p119 = scmp.ne.s32.totalorder %s108, %s111
      %p120 = scmp.eq.s32.totalorder %s25, 1
      %p121 = por %p119, %p120
      %p122 = scmp.ne.s32.totalorder %s111, %s112
      %p123 = scmp.eq.s32.totalorder %s25, 0
      %p124 = por %p122, %p123
      %p125 = scmp.ne.s32.totalorder %s111, %s112
      %p126 = scmp.eq.s32.totalorder %s26, 1
      %p127 = por %p125, %p126
      %p129 = scmp.ne.s32.totalorder %s112, %s128
      %p130 = scmp.eq.s32.totalorder %s26, 0
      %p131 = por %p129, %p130
      %s133 = sadd.s32 %s132, 1
      %p136 = scmp.eq.s32.totalorder %s20, 1
      %p137 = scmp.ne.s32.totalorder %s132, %s134
      %p138 = scmp.eq.s32.totalorder %s20, 0
      %p139 = por %p137, %p138
      %p140 = scmp.ne.s32.totalorder %s132, %s134
      %p141 = scmp.eq.s32.totalorder %s25, 1
      %p142 = por %p140, %p141
      %p143 = scmp.ne.s32.totalorder %s134, %s135
      %p144 = scmp.eq.s32.totalorder %s25, 0
      %p145 = por %p143, %p144
      %p146 = scmp.ne.s32.totalorder %s134, %s135
      %p147 = scmp.eq.s32.totalorder %s26, 1
      %p148 = por %p146, %p147
      %p150 = scmp.ne.s32.totalorder %s135, %s149
      %p151 = scmp.eq.s32.totalorder %s26, 0
      %p152 = por %p150, %p151
      %s153 = ssub.s32 %s20, %s27
      %p154 = scmp.eq.s32.totalorder %s153, 0
      %s156 = sadd.s32 %s155, 1
      %s157 = scalar_select %p154, %s155, %s156
      %p160 = pneg %p154
      %p161 = scmp.eq.s32.totalorder %s20, 1
      %p162 = por %p160, %p161
      %p163 = scmp.ne.s32.totalorder %s155, %s158
      %p164 = scmp.eq.s32.totalorder %s20, 0
      %p165 = por %p163, %p164
      %p166 = scmp.ne.s32.totalorder %s155, %s158
      %p167 = scmp.eq.s32.totalorder %s25, 1
      %p168 = por %p166, %p167
      %p169 = scmp.ne.s32.totalorder %s158, %s159
      %p170 = scmp.eq.s32.totalorder %s25, 0
      %p171 = por %p169, %p170
      %p172 = scmp.ne.s32.totalorder %s158, %s159
      %p173 = scmp.eq.s32.totalorder %s26, 1
      %p174 = por %p172, %p173
      %p176 = scmp.ne.s32.totalorder %s159, %s175
      %p177 = scmp.eq.s32.totalorder %s26, 0
      %p178 = por %p176, %p177
      %s179 = ssub.s32 %s20, %s27
      %p180 = scmp.eq.s32.totalorder %s179, 0
      %s182 = sadd.s32 %s181, 1
      %s183 = scalar_select %p180, %s181, %s182
      %p186 = pneg %p180
      %p187 = scmp.eq.s32.totalorder %s20, 1
      %p188 = por %p186, %p187
      %p189 = scmp.ne.s32.totalorder %s181, %s184
      %p190 = scmp.eq.s32.totalorder %s20, 0
      %p191 = por %p189, %p190
      %p192 = scmp.ne.s32.totalorder %s181, %s184
      %p193 = scmp.eq.s32.totalorder %s25, 1
      %p194 = por %p192, %p193
      %p195 = scmp.ne.s32.totalorder %s184, %s185
      %p196 = scmp.eq.s32.totalorder %s25, 0
      %p197 = por %p195, %p196
      %p198 = scmp.ne.s32.totalorder %s184, %s185
      %p199 = scmp.eq.s32.totalorder %s26, 1
      %p200 = por %p198, %p199
      %p202 = scmp.ne.s32.totalorder %s185, %s201
      %p203 = scmp.eq.s32.totalorder %s26, 0
      %p204 = por %p202, %p203
      %s205 = ssub.s32 %s20, %s27
      %p206 = scmp.eq.s32.totalorder %s205, 0
      %s208 = sadd.s32 %s207, 1
      %s209 = scalar_select %p206, %s207, %s208
      %p212 = pneg %p206
      %p213 = scmp.eq.s32.totalorder %s20, 1
      %p214 = por %p212, %p213
      %p215 = scmp.ne.s32.totalorder %s207, %s210
      %p216 = scmp.eq.s32.totalorder %s20, 0
      %p217 = por %p215, %p216
      %p218 = scmp.ne.s32.totalorder %s207, %s210
      %p219 = scmp.eq.s32.totalorder %s25, 1
      %p220 = por %p218, %p219
      %p221 = scmp.ne.s32.totalorder %s210, %s211
      %p222 = scmp.eq.s32.totalorder %s25, 0
      %p223 = por %p221, %p222
      %p224 = scmp.ne.s32.totalorder %s210, %s211
      %p225 = scmp.eq.s32.totalorder %s26, 1
      %p226 = por %p224, %p225
      %p228 = scmp.ne.s32.totalorder %s211, %s227
      %p229 = scmp.eq.s32.totalorder %s26, 0
      %p230 = por %p228, %p229
      %p231 = scmp.le.s32.totalorder 1, %s20
      %p232 = scmp.lt.s32.totalorder %s20, 3
      %p233 = pnand %p231, %p232
      %p234 = pneg %p233
      // Predicated region
      $region9: #{tpu_custom_call.1} parent=5 // pred_check
        _
      $region10: #{tpu_custom_call.1} parent=5 // pred_check_branch
        %236 = sbr.rel (%p233) target = $region12
      $region11: #{tpu_custom_call.1} parent=5 // pred_region
        %s237 = ssub.s32 %s20, 1
        // Predicated region
        $region13: #{tpu_custom_call.1} parent=11 // pred_check
          %p238 = pneg %p145
        $region14: #{tpu_custom_call.1} parent=11 // pred_check_branch
          %240 = sbr.rel (%p238) target = $region16
        $region15: #{tpu_custom_call.1} parent=11 // pred_region
          _
        $region16: #{tpu_custom_call.1} parent=11 // pred_fallthru
          _
      $region12: #{tpu_custom_call.1} parent=5 // pred_fallthru
        _
      %p241 = scmp.lt.s32.totalorder %s20, 2
      // Predicated region
      $region17: #{tpu_custom_call.1} parent=5 // pred_check
        %p242 = pneg %p241
      $region18: #{tpu_custom_call.1} parent=5 // pred_check_branch
        %244 = sbr.rel (%p242) target = $region20
      $region19: #{tpu_custom_call.1} parent=5 // pred_region
        // Predicated region
        $region21: #{tpu_custom_call.1} parent=19 // pred_check
          %p245 = pneg %p40
        $region22: #{tpu_custom_call.1} parent=19 // pred_check_branch
          %247 = sbr.rel (%p245) target = $region24
        $region23: #{tpu_custom_call.1} parent=19 // pred_region
          %p248 = scmp.lt.s32.totalorder %s20, 1
          %s249 = scalar_select %p248, %s20, 1
          %s250 = smul.addr %s249, 18
          %s251 = smul.addr %s250, 8
          %s252 = scalar_lea.vmem %s0, %s251
        $region24: #{tpu_custom_call.1} parent=19 // pred_fallthru
          _
        // Predicated region
        $region25: #{tpu_custom_call.1} parent=19 // pred_check
          %p253 = pneg %p66
        $region26: #{tpu_custom_call.1} parent=19 // pred_check_branch
          %255 = sbr.rel (%p253) target = $region28
        $region27: #{tpu_custom_call.1} parent=19 // pred_region
          %p256 = scmp.lt.s32.totalorder %s20, 1
          %s257 = scalar_select %p256, %s20, 1
          %s258 = smul.addr %s257, 18
          %s259 = smul.addr %s258, 8
          %s260 = scalar_lea.vmem %s1, %s259
        $region28: #{tpu_custom_call.1} parent=19 // pred_fallthru
          _
        // Predicated region
        $region29: #{tpu_custom_call.1} parent=19 // pred_check
          %p261 = pneg %p92
        $region30: #{tpu_custom_call.1} parent=19 // pred_check_branch
          %263 = sbr.rel (%p261) target = $region32
        $region31: #{tpu_custom_call.1} parent=19 // pred_region
          %p264 = scmp.lt.s32.totalorder %s20, 1
          %s265 = scalar_select %p264, %s20, 1
          %s266 = smul.addr %s265, 18
          %s267 = smul.addr %s266, 8
          %s268 = scalar_lea.vmem %s2, %s267
        $region32: #{tpu_custom_call.1} parent=19 // pred_fallthru
          _
        // Predicated region
        $region33: #{tpu_custom_call.1} parent=19 // pred_check
          %p269 = pneg %p118
        $region34: #{tpu_custom_call.1} parent=19 // pred_check_branch
          %271 = sbr.rel (%p269) target = $region36
        $region35: #{tpu_custom_call.1} parent=19 // pred_region
          %p272 = scmp.lt.s32.totalorder %s20, 1
          %s273 = scalar_select %p272, %s20, 1
          %s274 = smul.addr %s273, 18
          %s275 = smul.addr %s274, 8
          %s276 = scalar_lea.vmem %s3, %s275
        $region36: #{tpu_custom_call.1} parent=19 // pred_fallthru
          _
      $region20: #{tpu_custom_call.1} parent=5 // pred_fallthru
        _
      %p277 = scmp.le.s32.totalorder 1, %s20
      %p278 = scmp.lt.s32.totalorder %s20, 3
      %p279 = pnand %p277, %p278
      %p280 = pneg %p279
      // Predicated region
      $region37: #{tpu_custom_call.1} parent=5 // pred_check
        _
      $region38: #{tpu_custom_call.1} parent=5 // pred_check_branch
        %282 = sbr.rel (%p279) target = $region40
      $region39: #{tpu_custom_call.1} parent=5 // pred_region
        %s283 = ssub.s32 %s20, 1
        %p284 = scmp.lt.s32.totalorder %s25, 1
        %s285 = scalar_select %p284, %s25, 1
        %s286 = smul.addr %s285, 18
        %s287 = smul.addr %s286, 8
        %s288 = scalar_lea.vmem %s0, %s287
        %p289 = pneg %p46
        %p290 = pneg %p43
        %p291 = scmp.lt.s32.totalorder %s25, 1
        %s292 = scalar_select %p291, %s25, 1
        %s293 = smul.addr %s292, 18
        %s294 = smul.addr %s293, 8
        %s295 = scalar_lea.vmem %s1, %s294
        %p296 = pneg %p72
        %p297 = pneg %p69
        %p298 = scmp.lt.s32.totalorder %s25, 1
        %s299 = scalar_select %p298, %s25, 1
        %s300 = smul.addr %s299, 18
        %s301 = smul.addr %s300, 8
        %s302 = scalar_lea.vmem %s2, %s301
        %p303 = pneg %p98
        %p304 = pneg %p95
        %p305 = scmp.lt.s32.totalorder %s25, 1
        %s306 = scalar_select %p305, %s25, 1
        %s307 = smul.addr %s306, 18
        %s308 = smul.addr %s307, 8
        %s309 = scalar_lea.vmem %s3, %s308
        %p310 = pneg %p124
        %p311 = pneg %p121
        %p312 = pneg %p145
        %p313 = pneg %p142
        %p314 = pneg %p171
        %p315 = pneg %p168
        %s316 = sand.u32 %s158, 1
        %s317 = scalar_lea.sflag [#allocation3], %s316
        %s318 = sand.u32 %s158, 1
        %s319 = smul.addr %s318, 64
        %s320 = scalar_lea.vmem [#allocation2], %s319
        %p321 = pneg %p197
        %p322 = pneg %p194
        %s323 = sand.u32 %s25, 1
        %s324 = scalar_lea.sflag [#allocation5], %s323
        %s325 = sand.u32 %s184, 1
        %s326 = scalar_lea.vmem [#allocation4], %s325
        %p327 = pneg %p223
        %p328 = pneg %p220
        %s329 = sand.u32 %s25, 1
        %s330 = scalar_lea.sflag [#allocation5], %s329
        %s331 = sand.u32 %s210, 1
        %s332 = scalar_lea.vmem [#allocation6], %s331
        %p333 = scmp.lt.s32.totalorder %s25, 1
        %s334 = scalar_select %p333, %s25, 1
        %s335 = smul.addr %s334, 18
        %s336 = smul.addr %s335, 8
        %s337 = scalar_lea.vmem %s0, %s336
        %p338 = scmp.lt.s32.totalorder %s25, 1
        %s339 = scalar_select %p338, %s25, 1
        %s340 = smul.addr %s339, 18
        %s341 = smul.addr %s340, 8
        %s342 = scalar_lea.vmem %s1, %s341
        %p343 = scmp.lt.s32.totalorder %s25, 1
        %s344 = scalar_select %p343, %s25, 1
        %s345 = smul.addr %s344, 18
        %s346 = smul.addr %s345, 8
        %s347 = scalar_lea.vmem %s2, %s346
        %p348 = scmp.lt.s32.totalorder %s25, 1
        %s349 = scalar_select %p348, %s25, 1
        %s350 = smul.addr %s349, 18
        %s351 = smul.addr %s350, 8
        %s352 = scalar_lea.vmem %s3, %s351
        %v353 = vld [vmem:[%s337] sm:$0xff]
        %v354 = vld [vmem:[%s337 + $0x10] sm:$0xff]
        %v355 = vld [vmem:[%s337 + $0x20] sm:$0xff]
        %v356 = vld [vmem:[%s337 + $0x30] sm:$0xff]
        %v357 = vld [vmem:[%s337 + $0x40] sm:$0xff]
        %v358 = vld [vmem:[%s337 + $0x50] sm:$0xff]
        %v359 = vld [vmem:[%s337 + $0x60] sm:$0xff]
        %v360 = vld [vmem:[%s337 + $0x70] sm:$0xff]
        %v361 = vld [vmem:[%s4] sm:$0xf]
        %v362 = vld [vmem:[%s342] sm:$0xff]
        %v363 = vld [vmem:[%s342 + $0x10] sm:$0xff]
        %v364 = vld [vmem:[%s342 + $0x20] sm:$0xff]
        %v365 = vld [vmem:[%s342 + $0x30] sm:$0xff]
        %v366 = vld [vmem:[%s342 + $0x40] sm:$0xff]
        %v367 = vld [vmem:[%s342 + $0x50] sm:$0xff]
        %v368 = vld [vmem:[%s342 + $0x60] sm:$0xff]
        %v369 = vld [vmem:[%s342 + $0x70] sm:$0xff]
        %s370 = scalar_lea.vmem %s4, 4
        %v371 = vld [vmem:[%s370] sm:$0xf]
        %vm372 = vcmask 31744
        %v374 = vsel %vm372, %v362, 0
        %v377 = vsel %vm372, %v363, 0
        %v380 = vsel %vm372, %v364, 0
        %v383 = vsel %vm372, %v365, 0
        %v386 = vsel %vm372, %v366, 0
        %v389 = vsel %vm372, %v367, 0
        %v392 = vsel %vm372, %v368, 0
        %v395 = vsel %vm372, %v369, 0
        %vm397 = vcmask 1043456
        %v399 = vsel %vm397, %v371, 0
        %401 = vmatpush.msra.mxu0 0.0
        %402 = vmatpush.msra.mxu0 0.0
        %403 = vmatpush.msra.mxu0 0.0
        %404 = vmatpush.msra.mxu0 0.0
        %405 = vmatpush.msra.mxu0 0.0
        %406 = vmatpush.msra.mxu0 0.0
        %407 = vmatpush.msra.mxu0 0.0
        %408 = vmatpush.msra.mxu0 0.0
        %409 = vmatpush.msra.mxu0 0.0
        %410 = vmatpush.msra.mxu0 0.0
        %411 = vmatpush.msra.mxu0 0.0
        %412 = vmatpush.msra.mxu0 0.0
        %413 = vmatpush.msra.mxu0 0.0
        %414 = vmatpush.msra.mxu0 0.0
        %415 = vmatpush.msra.mxu0 0.0
        %416 = vmatpush.msra.mxu0 %v399
        %417 = vmatmul.f32.gmra.mxu0 %v374
        %v418 = vpop.f32.mrf.mxu0
        %v419 = vadd.f32 0.0, %v418
        %420 = vmatmul.f32.gmra.mxu0 %v377
        %v421 = vpop.f32.mrf.mxu0
        %v422 = vadd.f32 0.0, %v421
        %423 = vmatmul.f32.gmra.mxu0 %v380
        %v424 = vpop.f32.mrf.mxu0
        %v425 = vadd.f32 0.0, %v424
        %426 = vmatmul.f32.gmra.mxu0 %v383
        %v427 = vpop.f32.mrf.mxu0
        %v428 = vadd.f32 0.0, %v427
        %429 = vmatmul.f32.gmra.mxu0 %v386
        %v430 = vpop.f32.mrf.mxu0
        %v431 = vadd.f32 0.0, %v430
        %432 = vmatmul.f32.gmra.mxu0 %v389
        %v433 = vpop.f32.mrf.mxu0
        %v434 = vadd.f32 0.0, %v433
        %435 = vmatmul.f32.gmra.mxu0 %v392
        %v436 = vpop.f32.mrf.mxu0
        %v437 = vadd.f32 0.0, %v436
        %438 = vmatmul.f32.gmra.mxu0 %v395
        %v439 = vpop.f32.mrf.mxu0
        %v440 = vadd.f32 0.0, %v439
        %441 = vdwg.mxu0
        %v443 = vsel %vm372, %v353, 0
        %v446 = vsel %vm372, %v354, 0
        %v449 = vsel %vm372, %v355, 0
        %v452 = vsel %vm372, %v356, 0
        %v455 = vsel %vm372, %v357, 0
        %v458 = vsel %vm372, %v358, 0
        %v461 = vsel %vm372, %v359, 0
        %v464 = vsel %vm372, %v360, 0
        %v467 = vsel %vm397, %v361, 0
        %469 = vmatpush.msra.mxu0 0.0
        %470 = vmatpush.msra.mxu0 0.0
        %471 = vmatpush.msra.mxu0 0.0
        %472 = vmatpush.msra.mxu0 0.0
        %473 = vmatpush.msra.mxu0 0.0
        %474 = vmatpush.msra.mxu0 0.0
        %475 = vmatpush.msra.mxu0 0.0
        %476 = vmatpush.msra.mxu0 0.0
        %477 = vmatpush.msra.mxu0 0.0
        %478 = vmatpush.msra.mxu0 0.0
        %479 = vmatpush.msra.mxu0 0.0
        %480 = vmatpush.msra.mxu0 0.0
        %481 = vmatpush.msra.mxu0 0.0
        %482 = vmatpush.msra.mxu0 0.0
        %483 = vmatpush.msra.mxu0 0.0
        %484 = vmatpush.msra.mxu0 %v467
        %485 = vmatmul.f32.gmra.mxu0 %v443
        %v486 = vpop.f32.mrf.mxu0
        %v487 = vadd.f32 %v419, %v486
        %488 = vmatmul.f32.gmra.mxu0 %v446
        %v489 = vpop.f32.mrf.mxu0
        %v490 = vadd.f32 %v422, %v489
        %491 = vmatmul.f32.gmra.mxu0 %v449
        %v492 = vpop.f32.mrf.mxu0
        %v493 = vadd.f32 %v425, %v492
        %494 = vmatmul.f32.gmra.mxu0 %v452
        %v495 = vpop.f32.mrf.mxu0
        %v496 = vadd.f32 %v428, %v495
        %497 = vmatmul.f32.gmra.mxu0 %v455
        %v498 = vpop.f32.mrf.mxu0
        %v499 = vadd.f32 %v431, %v498
        %500 = vmatmul.f32.gmra.mxu0 %v458
        %v501 = vpop.f32.mrf.mxu0
        %v502 = vadd.f32 %v434, %v501
        %503 = vmatmul.f32.gmra.mxu0 %v461
        %v504 = vpop.f32.mrf.mxu0
        %v505 = vadd.f32 %v437, %v504
        %506 = vmatmul.f32.gmra.mxu0 %v464
        %v507 = vpop.f32.mrf.mxu0
        %v508 = vadd.f32 %v440, %v507
        %509 = vdwg.mxu0
        %v510 = vld [vmem:[%s337 + $0x1] sm:$0xff]
        %v511 = vld [vmem:[%s337 + $0x11] sm:$0xff]
        %v512 = vld [vmem:[%s337 + $0x21] sm:$0xff]
        %v513 = vld [vmem:[%s337 + $0x31] sm:$0xff]
        %v514 = vld [vmem:[%s337 + $0x41] sm:$0xff]
        %v515 = vld [vmem:[%s337 + $0x51] sm:$0xff]
        %v516 = vld [vmem:[%s337 + $0x61] sm:$0xff]
        %v517 = vld [vmem:[%s337 + $0x71] sm:$0xff]
        %s518 = scalar_lea.vmem %s4, 8
        %v519 = vld [vmem:[%s518] sm:$0xf]
        %v521 = vsel %vm372, %v510, 0
        %v524 = vsel %vm372, %v511, 0
        %v527 = vsel %vm372, %v512, 0
        %v530 = vsel %vm372, %v513, 0
        %v533 = vsel %vm372, %v514, 0
        %v536 = vsel %vm372, %v515, 0
        %v539 = vsel %vm372, %v516, 0
        %v542 = vsel %vm372, %v517, 0
        %v545 = vsel %vm397, %v519, 0
        %547 = vmatpush.msra.mxu0 0.0
        %548 = vmatpush.msra.mxu0 0.0
        %549 = vmatpush.msra.mxu0 0.0
        %550 = vmatpush.msra.mxu0 0.0
        %551 = vmatpush.msra.mxu0 0.0
        %552 = vmatpush.msra.mxu0 0.0
        %553 = vmatpush.msra.mxu0 0.0
        %554 = vmatpush.msra.mxu0 0.0
        %555 = vmatpush.msra.mxu0 0.0
        %556 = vmatpush.msra.mxu0 0.0
        %557 = vmatpush.msra.mxu0 0.0
        %558 = vmatpush.msra.mxu0 0.0
        %559 = vmatpush.msra.mxu0 0.0
        %560 = vmatpush.msra.mxu0 0.0
        %561 = vmatpush.msra.mxu0 0.0
        %562 = vmatpush.msra.mxu0 %v545
        %563 = vmatmul.f32.gmra.mxu0 %v521
        %v564 = vpop.f32.mrf.mxu0
        %v565 = vadd.f32 0.0, %v564
        %566 = vmatmul.f32.gmra.mxu0 %v524
        %v567 = vpop.f32.mrf.mxu0
        %v568 = vadd.f32 0.0, %v567
        %569 = vmatmul.f32.gmra.mxu0 %v527
        %v570 = vpop.f32.mrf.mxu0
        %v571 = vadd.f32 0.0, %v570
        %572 = vmatmul.f32.gmra.mxu0 %v530
        %v573 = vpop.f32.mrf.mxu0
        %v574 = vadd.f32 0.0, %v573
        %575 = vmatmul.f32.gmra.mxu0 %v533
        %v576 = vpop.f32.mrf.mxu0
        %v577 = vadd.f32 0.0, %v576
        %578 = vmatmul.f32.gmra.mxu0 %v536
        %v579 = vpop.f32.mrf.mxu0
        %v580 = vadd.f32 0.0, %v579
        %581 = vmatmul.f32.gmra.mxu0 %v539
        %v582 = vpop.f32.mrf.mxu0
        %v583 = vadd.f32 0.0, %v582
        %584 = vmatmul.f32.gmra.mxu0 %v542
        %v585 = vpop.f32.mrf.mxu0
        %v586 = vadd.f32 0.0, %v585
        %587 = vdwg.mxu0
        %v588 = vadd.f32 %v487, %v565
        %v589 = vadd.f32 %v490, %v568
        %v590 = vadd.f32 %v493, %v571
        %v591 = vadd.f32 %v496, %v574
        %v592 = vadd.f32 %v499, %v577
        %v593 = vadd.f32 %v502, %v580
        %v594 = vadd.f32 %v505, %v583
        %v595 = vadd.f32 %v508, %v586
        %v596 = vld [vmem:[%s347] sm:$0xff]
        %v597 = vld [vmem:[%s347 + $0x10] sm:$0xff]
        %v598 = vld [vmem:[%s347 + $0x20] sm:$0xff]
        %v599 = vld [vmem:[%s347 + $0x30] sm:$0xff]
        %v600 = vld [vmem:[%s347 + $0x40] sm:$0xff]
        %v601 = vld [vmem:[%s347 + $0x50] sm:$0xff]
        %v602 = vld [vmem:[%s347 + $0x60] sm:$0xff]
        %v603 = vld [vmem:[%s347 + $0x70] sm:$0xff]
        %s604 = scalar_lea.vmem %s4, 12
        %v605 = vld [vmem:[%s604] sm:$0xf]
        %v607 = vsel %vm372, %v596, 0
        %v610 = vsel %vm372, %v597, 0
        %v613 = vsel %vm372, %v598, 0
        %v616 = vsel %vm372, %v599, 0
        %v619 = vsel %vm372, %v600, 0
        %v622 = vsel %vm372, %v601, 0
        %v625 = vsel %vm372, %v602, 0
        %v628 = vsel %vm372, %v603, 0
        %v631 = vsel %vm397, %v605, 0
        %633 = vmatpush.msra.mxu0 0.0
        %634 = vmatpush.msra.mxu0 0.0
        %635 = vmatpush.msra.mxu0 0.0
        %636 = vmatpush.msra.mxu0 0.0
        %637 = vmatpush.msra.mxu0 0.0
        %638 = vmatpush.msra.mxu0 0.0
        %639 = vmatpush.msra.mxu0 0.0
        %640 = vmatpush.msra.mxu0 0.0
        %641 = vmatpush.msra.mxu0 0.0
        %642 = vmatpush.msra.mxu0 0.0
        %643 = vmatpush.msra.mxu0 0.0
        %644 = vmatpush.msra.mxu0 0.0
        %645 = vmatpush.msra.mxu0 0.0
        %646 = vmatpush.msra.mxu0 0.0
        %647 = vmatpush.msra.mxu0 0.0
        %648 = vmatpush.msra.mxu0 %v631
        %649 = vmatmul.f32.gmra.mxu0 %v607
        %v650 = vpop.f32.mrf.mxu0
        %v651 = vadd.f32 0.0, %v650
        %652 = vmatmul.f32.gmra.mxu0 %v610
        %v653 = vpop.f32.mrf.mxu0
        %v654 = vadd.f32 0.0, %v653
        %655 = vmatmul.f32.gmra.mxu0 %v613
        %v656 = vpop.f32.mrf.mxu0
        %v657 = vadd.f32 0.0, %v656
        %658 = vmatmul.f32.gmra.mxu0 %v616
        %v659 = vpop.f32.mrf.mxu0
        %v660 = vadd.f32 0.0, %v659
        %661 = vmatmul.f32.gmra.mxu0 %v619
        %v662 = vpop.f32.mrf.mxu0
        %v663 = vadd.f32 0.0, %v662
        %664 = vmatmul.f32.gmra.mxu0 %v622
        %v665 = vpop.f32.mrf.mxu0
        %v666 = vadd.f32 0.0, %v665
        %667 = vmatmul.f32.gmra.mxu0 %v625
        %v668 = vpop.f32.mrf.mxu0
        %v669 = vadd.f32 0.0, %v668
        %670 = vmatmul.f32.gmra.mxu0 %v628
        %v671 = vpop.f32.mrf.mxu0
        %v672 = vadd.f32 0.0, %v671
        %673 = vdwg.mxu0
        %v674 = vadd.f32 %v588, %v651
        %v675 = vadd.f32 %v589, %v654
        %v676 = vadd.f32 %v590, %v657
        %v677 = vadd.f32 %v591, %v660
        %v678 = vadd.f32 %v592, %v663
        %v679 = vadd.f32 %v593, %v666
        %v680 = vadd.f32 %v594, %v669
        %v681 = vadd.f32 %v595, %v672
        %v682 = vld [vmem:[%s352] sm:$0xff]
        %v683 = vld [vmem:[%s352 + $0x10] sm:$0xff]
        %v684 = vld [vmem:[%s352 + $0x20] sm:$0xff]
        %v685 = vld [vmem:[%s352 + $0x30] sm:$0xff]
        %v686 = vld [vmem:[%s352 + $0x40] sm:$0xff]
        %v687 = vld [vmem:[%s352 + $0x50] sm:$0xff]
        %v688 = vld [vmem:[%s352 + $0x60] sm:$0xff]
        %v689 = vld [vmem:[%s352 + $0x70] sm:$0xff]
        %s690 = scalar_lea.vmem %s4, 16
        %v691 = vld [vmem:[%s690] sm:$0xf]
        %v693 = vsel %vm372, %v682, 0
        %v696 = vsel %vm372, %v683, 0
        %v699 = vsel %vm372, %v684, 0
        %v702 = vsel %vm372, %v685, 0
        %v705 = vsel %vm372, %v686, 0
        %v708 = vsel %vm372, %v687, 0
        %v711 = vsel %vm372, %v688, 0
        %v714 = vsel %vm372, %v689, 0
        %v717 = vsel %vm397, %v691, 0
        %719 = vmatpush.msra.mxu0 0.0
        %720 = vmatpush.msra.mxu0 0.0
        %721 = vmatpush.msra.mxu0 0.0
        %722 = vmatpush.msra.mxu0 0.0
        %723 = vmatpush.msra.mxu0 0.0
        %724 = vmatpush.msra.mxu0 0.0
        %725 = vmatpush.msra.mxu0 0.0
        %726 = vmatpush.msra.mxu0 0.0
        %727 = vmatpush.msra.mxu0 0.0
        %728 = vmatpush.msra.mxu0 0.0
        %729 = vmatpush.msra.mxu0 0.0
        %730 = vmatpush.msra.mxu0 0.0
        %731 = vmatpush.msra.mxu0 0.0
        %732 = vmatpush.msra.mxu0 0.0
        %733 = vmatpush.msra.mxu0 0.0
        %734 = vmatpush.msra.mxu0 %v717
        %735 = vmatmul.f32.gmra.mxu0 %v693
        %v736 = vpop.f32.mrf.mxu0
        %v737 = vadd.f32 0.0, %v736
        %738 = vmatmul.f32.gmra.mxu0 %v696
        %v739 = vpop.f32.mrf.mxu0
        %v740 = vadd.f32 0.0, %v739
        %741 = vmatmul.f32.gmra.mxu0 %v699
        %v742 = vpop.f32.mrf.mxu0
        %v743 = vadd.f32 0.0, %v742
        %744 = vmatmul.f32.gmra.mxu0 %v702
        %v745 = vpop.f32.mrf.mxu0
        %v746 = vadd.f32 0.0, %v745
        %747 = vmatmul.f32.gmra.mxu0 %v705
        %v748 = vpop.f32.mrf.mxu0
        %v749 = vadd.f32 0.0, %v748
        %750 = vmatmul.f32.gmra.mxu0 %v708
        %v751 = vpop.f32.mrf.mxu0
        %v752 = vadd.f32 0.0, %v751
        %753 = vmatmul.f32.gmra.mxu0 %v711
        %v754 = vpop.f32.mrf.mxu0
        %v755 = vadd.f32 0.0, %v754
        %756 = vmatmul.f32.gmra.mxu0 %v714
        %v757 = vpop.f32.mrf.mxu0
        %v758 = vadd.f32 0.0, %v757
        %759 = vdwg.mxu0
        %v760 = vadd.f32 %v674, %v737
        %v761 = vadd.f32 %v675, %v740
        %v762 = vadd.f32 %v676, %v743
        %v763 = vadd.f32 %v677, %v746
        %v764 = vadd.f32 %v678, %v749
        %v765 = vadd.f32 %v679, %v752
        %v766 = vadd.f32 %v680, %v755
        %v767 = vadd.f32 %v681, %v758
        %v768 = vld [vmem:[%s347 + $0x1] sm:$0xff]
        %v769 = vld [vmem:[%s347 + $0x11] sm:$0xff]
        %v770 = vld [vmem:[%s347 + $0x21] sm:$0xff]
        %v771 = vld [vmem:[%s347 + $0x31] sm:$0xff]
        %v772 = vld [vmem:[%s347 + $0x41] sm:$0xff]
        %v773 = vld [vmem:[%s347 + $0x51] sm:$0xff]
        %v774 = vld [vmem:[%s347 + $0x61] sm:$0xff]
        %v775 = vld [vmem:[%s347 + $0x71] sm:$0xff]
        %s776 = scalar_lea.vmem %s4, 20
        %v777 = vld [vmem:[%s776] sm:$0xf]
        %v779 = vsel %vm372, %v768, 0
        %v782 = vsel %vm372, %v769, 0
        %v785 = vsel %vm372, %v770, 0
        %v788 = vsel %vm372, %v771, 0
        %v791 = vsel %vm372, %v772, 0
        %v794 = vsel %vm372, %v773, 0
        %v797 = vsel %vm372, %v774, 0
        %v800 = vsel %vm372, %v775, 0
        %v803 = vsel %vm397, %v777, 0
        %805 = vmatpush.msra.mxu0 0.0
        %806 = vmatpush.msra.mxu0 0.0
        %807 = vmatpush.msra.mxu0 0.0
        %808 = vmatpush.msra.mxu0 0.0
        %809 = vmatpush.msra.mxu0 0.0
        %810 = vmatpush.msra.mxu0 0.0
        %811 = vmatpush.msra.mxu0 0.0
        %812 = vmatpush.msra.mxu0 0.0
        %813 = vmatpush.msra.mxu0 0.0
        %814 = vmatpush.msra.mxu0 0.0
        %815 = vmatpush.msra.mxu0 0.0
        %816 = vmatpush.msra.mxu0 0.0
        %817 = vmatpush.msra.mxu0 0.0
        %818 = vmatpush.msra.mxu0 0.0
        %819 = vmatpush.msra.mxu0 0.0
        %820 = vmatpush.msra.mxu0 %v803
        %821 = vmatmul.f32.gmra.mxu0 %v779
        %v822 = vpop.f32.mrf.mxu0
        %v823 = vadd.f32 0.0, %v822
        %824 = vmatmul.f32.gmra.mxu0 %v782
        %v825 = vpop.f32.mrf.mxu0
        %v826 = vadd.f32 0.0, %v825
        %827 = vmatmul.f32.gmra.mxu0 %v785
        %v828 = vpop.f32.mrf.mxu0
        %v829 = vadd.f32 0.0, %v828
        %830 = vmatmul.f32.gmra.mxu0 %v788
        %v831 = vpop.f32.mrf.mxu0
        %v832 = vadd.f32 0.0, %v831
        %833 = vmatmul.f32.gmra.mxu0 %v791
        %v834 = vpop.f32.mrf.mxu0
        %v835 = vadd.f32 0.0, %v834
        %836 = vmatmul.f32.gmra.mxu0 %v794
        %v837 = vpop.f32.mrf.mxu0
        %v838 = vadd.f32 0.0, %v837
        %839 = vmatmul.f32.gmra.mxu0 %v797
        %v840 = vpop.f32.mrf.mxu0
        %v841 = vadd.f32 0.0, %v840
        %842 = vmatmul.f32.gmra.mxu0 %v800
        %v843 = vpop.f32.mrf.mxu0
        %v844 = vadd.f32 0.0, %v843
        %845 = vdwg.mxu0
        %v846 = vadd.f32 %v760, %v823
        %v847 = vadd.f32 %v761, %v826
        %v848 = vadd.f32 %v762, %v829
        %v849 = vadd.f32 %v763, %v832
        %v850 = vadd.f32 %v764, %v835
        %v851 = vadd.f32 %v765, %v838
        %v852 = vadd.f32 %v766, %v841
        %v853 = vadd.f32 %v767, %v844
        %s854 = scalar_lea.vmem %s337, 16
        %v855 = vld [vmem:[%s854] sm:$0xff]
        %v856 = vld [vmem:[%s854 + $0x10] sm:$0xff]
        %v857 = vld [vmem:[%s854 + $0x20] sm:$0xff]
        %v858 = vld [vmem:[%s854 + $0x30] sm:$0xff]
        %v859 = vld [vmem:[%s854 + $0x40] sm:$0xff]
        %v860 = vld [vmem:[%s854 + $0x50] sm:$0xff]
        %v861 = vld [vmem:[%s854 + $0x60] sm:$0xff]
        %v862 = vld [vmem:[%s854 + $0x70] sm:$0xff]
        %s863 = scalar_lea.vmem %s4, 24
        %v864 = vld [vmem:[%s863] sm:$0xf]
        %v866 = vsel %vm372, %v855, 0
        %v869 = vsel %vm372, %v856, 0
        %v872 = vsel %vm372, %v857, 0
        %v875 = vsel %vm372, %v858, 0
        %v878 = vsel %vm372, %v859, 0
        %v881 = vsel %vm372, %v860, 0
        %v884 = vsel %vm372, %v861, 0
        %v887 = vsel %vm372, %v862, 0
        %v890 = vsel %vm397, %v864, 0
        %892 = vmatpush.msra.mxu0 0.0
        %893 = vmatpush.msra.mxu0 0.0
        %894 = vmatpush.msra.mxu0 0.0
        %895 = vmatpush.msra.mxu0 0.0
        %896 = vmatpush.msra.mxu0 0.0
        %897 = vmatpush.msra.mxu0 0.0
        %898 = vmatpush.msra.mxu0 0.0
        %899 = vmatpush.msra.mxu0 0.0
        %900 = vmatpush.msra.mxu0 0.0
        %901 = vmatpush.msra.mxu0 0.0
        %902 = vmatpush.msra.mxu0 0.0
        %903 = vmatpush.msra.mxu0 0.0
        %904 = vmatpush.msra.mxu0 0.0
        %905 = vmatpush.msra.mxu0 0.0
        %906 = vmatpush.msra.mxu0 0.0
        %907 = vmatpush.msra.mxu0 %v890
        %908 = vmatmul.f32.gmra.mxu0 %v866
        %v909 = vpop.f32.mrf.mxu0
        %v910 = vadd.f32 0.0, %v909
        %911 = vmatmul.f32.gmra.mxu0 %v869
        %v912 = vpop.f32.mrf.mxu0
        %v913 = vadd.f32 0.0, %v912
        %914 = vmatmul.f32.gmra.mxu0 %v872
        %v915 = vpop.f32.mrf.mxu0
        %v916 = vadd.f32 0.0, %v915
        %917 = vmatmul.f32.gmra.mxu0 %v875
        %v918 = vpop.f32.mrf.mxu0
        %v919 = vadd.f32 0.0, %v918
        %920 = vmatmul.f32.gmra.mxu0 %v878
        %v921 = vpop.f32.mrf.mxu0
        %v922 = vadd.f32 0.0, %v921
        %923 = vmatmul.f32.gmra.mxu0 %v881
        %v924 = vpop.f32.mrf.mxu0
        %v925 = vadd.f32 0.0, %v924
        %926 = vmatmul.f32.gmra.mxu0 %v884
        %v927 = vpop.f32.mrf.mxu0
        %v928 = vadd.f32 0.0, %v927
        %929 = vmatmul.f32.gmra.mxu0 %v887
        %v930 = vpop.f32.mrf.mxu0
        %v931 = vadd.f32 0.0, %v930
        %932 = vdwg.mxu0
        %v933 = vadd.f32 %v846, %v910
        %v934 = vadd.f32 %v847, %v913
        %v935 = vadd.f32 %v848, %v916
        %v936 = vadd.f32 %v849, %v919
        %v937 = vadd.f32 %v850, %v922
        %v938 = vadd.f32 %v851, %v925
        %v939 = vadd.f32 %v852, %v928
        %v940 = vadd.f32 %v853, %v931
        %s941 = scalar_lea.vmem %s342, 16
        %v942 = vld [vmem:[%s941] sm:$0xff]
        %v943 = vld [vmem:[%s941 + $0x10] sm:$0xff]
        %v944 = vld [vmem:[%s941 + $0x20] sm:$0xff]
        %v945 = vld [vmem:[%s941 + $0x30] sm:$0xff]
        %v946 = vld [vmem:[%s941 + $0x40] sm:$0xff]
        %v947 = vld [vmem:[%s941 + $0x50] sm:$0xff]
        %v948 = vld [vmem:[%s941 + $0x60] sm:$0xff]
        %v949 = vld [vmem:[%s941 + $0x70] sm:$0xff]
        %s950 = scalar_lea.vmem %s4, 28
        %v951 = vld [vmem:[%s950] sm:$0xf]
        %v953 = vsel %vm372, %v942, 0
        %v956 = vsel %vm372, %v943, 0
        %v959 = vsel %vm372, %v944, 0
        %v962 = vsel %vm372, %v945, 0
        %v965 = vsel %vm372, %v946, 0
        %v968 = vsel %vm372, %v947, 0
        %v971 = vsel %vm372, %v948, 0
        %v974 = vsel %vm372, %v949, 0
        %v977 = vsel %vm397, %v951, 0
        %979 = vmatpush.msra.mxu0 0.0
        %980 = vmatpush.msra.mxu0 0.0
        %981 = vmatpush.msra.mxu0 0.0
        %982 = vmatpush.msra.mxu0 0.0
        %983 = vmatpush.msra.mxu0 0.0
        %984 = vmatpush.msra.mxu0 0.0
        %985 = vmatpush.msra.mxu0 0.0
        %986 = vmatpush.msra.mxu0 0.0
        %987 = vmatpush.msra.mxu0 0.0
        %988 = vmatpush.msra.mxu0 0.0
        %989 = vmatpush.msra.mxu0 0.0
        %990 = vmatpush.msra.mxu0 0.0
        %991 = vmatpush.msra.mxu0 0.0
        %992 = vmatpush.msra.mxu0 0.0
        %993 = vmatpush.msra.mxu0 0.0
        %994 = vmatpush.msra.mxu0 %v977
        %995 = vmatmul.f32.gmra.mxu0 %v953
        %v996 = vpop.f32.mrf.mxu0
        %v997 = vadd.f32 0.0, %v996
        %998 = vmatmul.f32.gmra.mxu0 %v956
        %v999 = vpop.f32.mrf.mxu0
        %v1000 = vadd.f32 0.0, %v999
        %1001 = vmatmul.f32.gmra.mxu0 %v959
        %v1002 = vpop.f32.mrf.mxu0
        %v1003 = vadd.f32 0.0, %v1002
        %1004 = vmatmul.f32.gmra.mxu0 %v962
        %v1005 = vpop.f32.mrf.mxu0
        %v1006 = vadd.f32 0.0, %v1005
        %1007 = vmatmul.f32.gmra.mxu0 %v965
        %v1008 = vpop.f32.mrf.mxu0
        %v1009 = vadd.f32 0.0, %v1008
        %1010 = vmatmul.f32.gmra.mxu0 %v968
        %v1011 = vpop.f32.mrf.mxu0
        %v1012 = vadd.f32 0.0, %v1011
        %1013 = vmatmul.f32.gmra.mxu0 %v971
        %v1014 = vpop.f32.mrf.mxu0
        %v1015 = vadd.f32 0.0, %v1014
        %1016 = vmatmul.f32.gmra.mxu0 %v974
        %v1017 = vpop.f32.mrf.mxu0
        %v1018 = vadd.f32 0.0, %v1017
        %1019 = vdwg.mxu0
        %v1020 = vadd.f32 %v933, %v997
        %v1021 = vadd.f32 %v934, %v1000
        %v1022 = vadd.f32 %v935, %v1003
        %v1023 = vadd.f32 %v936, %v1006
        %v1024 = vadd.f32 %v937, %v1009
        %v1025 = vadd.f32 %v938, %v1012
        %v1026 = vadd.f32 %v939, %v1015
        %v1027 = vadd.f32 %v940, %v1018
        %v1028 = vld [vmem:[%s854 + $0x1] sm:$0xff]
        %v1029 = vld [vmem:[%s854 + $0x11] sm:$0xff]
        %v1030 = vld [vmem:[%s854 + $0x21] sm:$0xff]
        %v1031 = vld [vmem:[%s854 + $0x31] sm:$0xff]
        %v1032 = vld [vmem:[%s854 + $0x41] sm:$0xff]
        %v1033 = vld [vmem:[%s854 + $0x51] sm:$0xff]
        %v1034 = vld [vmem:[%s854 + $0x61] sm:$0xff]
        %v1035 = vld [vmem:[%s854 + $0x71] sm:$0xff]
        %s1036 = scalar_lea.vmem %s4, 32
        %v1037 = vld [vmem:[%s1036] sm:$0xf]
        %v1039 = vsel %vm372, %v1028, 0
        %v1042 = vsel %vm372, %v1029, 0
        %v1045 = vsel %vm372, %v1030, 0
        %v1048 = vsel %vm372, %v1031, 0
        %v1051 = vsel %vm372, %v1032, 0
        %v1054 = vsel %vm372, %v1033, 0
        %v1057 = vsel %vm372, %v1034, 0
        %v1060 = vsel %vm372, %v1035, 0
        %v1063 = vsel %vm397, %v1037, 0
        %1065 = vmatpush.msra.mxu0 0.0
        %1066 = vmatpush.msra.mxu0 0.0
        %1067 = vmatpush.msra.mxu0 0.0
        %1068 = vmatpush.msra.mxu0 0.0
        %1069 = vmatpush.msra.mxu0 0.0
        %1070 = vmatpush.msra.mxu0 0.0
        %1071 = vmatpush.msra.mxu0 0.0
        %1072 = vmatpush.msra.mxu0 0.0
        %1073 = vmatpush.msra.mxu0 0.0
        %1074 = vmatpush.msra.mxu0 0.0
        %1075 = vmatpush.msra.mxu0 0.0
        %1076 = vmatpush.msra.mxu0 0.0
        %1077 = vmatpush.msra.mxu0 0.0
        %1078 = vmatpush.msra.mxu0 0.0
        %1079 = vmatpush.msra.mxu0 0.0
        %1080 = vmatpush.msra.mxu0 %v1063
        %1081 = vmatmul.f32.gmra.mxu0 %v1039
        %v1082 = vpop.f32.mrf.mxu0
        %v1083 = vadd.f32 0.0, %v1082
        %1084 = vmatmul.f32.gmra.mxu0 %v1042
        %v1085 = vpop.f32.mrf.mxu0
        %v1086 = vadd.f32 0.0, %v1085
        %1087 = vmatmul.f32.gmra.mxu0 %v1045
        %v1088 = vpop.f32.mrf.mxu0
        %v1089 = vadd.f32 0.0, %v1088
        %1090 = vmatmul.f32.gmra.mxu0 %v1048
        %v1091 = vpop.f32.mrf.mxu0
        %v1092 = vadd.f32 0.0, %v1091
        %1093 = vmatmul.f32.gmra.mxu0 %v1051
        %v1094 = vpop.f32.mrf.mxu0
        %v1095 = vadd.f32 0.0, %v1094
        %1096 = vmatmul.f32.gmra.mxu0 %v1054
        %v1097 = vpop.f32.mrf.mxu0
        %v1098 = vadd.f32 0.0, %v1097
        %1099 = vmatmul.f32.gmra.mxu0 %v1057
        %v1100 = vpop.f32.mrf.mxu0
        %v1101 = vadd.f32 0.0, %v1100
        %1102 = vmatmul.f32.gmra.mxu0 %v1060
        %v1103 = vpop.f32.mrf.mxu0
        %v1104 = vadd.f32 0.0, %v1103
        %1105 = vdwg.mxu0
        %v1106 = vadd.f32 %v1020, %v1083
        %v1107 = vadd.f32 %v1021, %v1086
        %v1108 = vadd.f32 %v1022, %v1089
        %v1109 = vadd.f32 %v1023, %v1092
        %v1110 = vadd.f32 %v1024, %v1095
        %v1111 = vadd.f32 %v1025, %v1098
        %v1112 = vadd.f32 %v1026, %v1101
        %v1113 = vadd.f32 %v1027, %v1104
        %1114 = vst [vmem:[%s320] sm:$0xff] %v1106
        %1115 = vst [vmem:[%s320 + $0x8] sm:$0xff] %v1107
        %1116 = vst [vmem:[%s320 + $0x10] sm:$0xff] %v1108
        %1117 = vst [vmem:[%s320 + $0x18] sm:$0xff] %v1109
        %1118 = vst [vmem:[%s320 + $0x20] sm:$0xff] %v1110
        %1119 = vst [vmem:[%s320 + $0x28] sm:$0xff] %v1111
        %1120 = vst [vmem:[%s320 + $0x30] sm:$0xff] %v1112
        %1121 = vst [vmem:[%s320 + $0x38] sm:$0xff] %v1113
        %v1122 = vadd.f32 %v1106, %v1107
        %v1123 = vadd.f32 %v1122, %v1108
        %v1124 = vadd.f32 %v1123, %v1109
        %v1125 = vadd.f32 %v1124, %v1110
        %v1126 = vadd.f32 %v1125, %v1111
        %v1127 = vadd.f32 %v1126, %v1112
        %v1128 = vadd.f32 %v1127, %v1113
        %v1129 = vrot.slane %v1128, 4
        %v1130 = vadd.f32 %v1128, %v1129
        %v1131 = vrot.slane %v1130, 2
        %v1132 = vadd.f32 %v1130, %v1131
        %v1133 = vrot.slane %v1132, 1
        %v1134 = vadd.f32 %v1132, %v1133
        %1135 = vst [vmem:[%s326] sm:$0x1] %v1134
        %v1136 = vmul.f32 %v1106, %v1106
        %v1137 = vmul.f32 %v1107, %v1107
        %v1138 = vmul.f32 %v1108, %v1108
        %v1139 = vmul.f32 %v1109, %v1109
        %v1140 = vmul.f32 %v1110, %v1110
        %v1141 = vmul.f32 %v1111, %v1111
        %v1142 = vmul.f32 %v1112, %v1112
        %v1143 = vmul.f32 %v1113, %v1113
        %v1144 = vadd.f32 %v1136, %v1137
        %v1145 = vadd.f32 %v1144, %v1138
        %v1146 = vadd.f32 %v1145, %v1139
        %v1147 = vadd.f32 %v1146, %v1140
        %v1148 = vadd.f32 %v1147, %v1141
        %v1149 = vadd.f32 %v1148, %v1142
        %v1150 = vadd.f32 %v1149, %v1143
        %v1151 = vrot.slane %v1150, 4
        %v1152 = vadd.f32 %v1150, %v1151
        %v1153 = vrot.slane %v1152, 2
        %v1154 = vadd.f32 %v1152, %v1153
        %v1155 = vrot.slane %v1154, 1
        %v1156 = vadd.f32 %v1154, %v1155
        %1157 = vst [vmem:[%s332] sm:$0x1] %v1156
        %s1158 = sand.u32 %s158, 1
        %s1159 = scalar_lea.sflag [#allocation3], %s1158
        %s1160 = sand.u32 %s158, 1
        %s1161 = smul.addr %s1160, 64
        %s1162 = scalar_lea.vmem [#allocation2], %s1161
        %s1163 = sand.u32 %s25, 1
        %s1164 = scalar_lea.sflag [#allocation5], %s1163
        %s1165 = sand.u32 %s184, 1
        %s1166 = scalar_lea.vmem [#allocation4], %s1165
        %s1167 = sand.u32 %s25, 1
        %s1168 = scalar_lea.sflag [#allocation5], %s1167
        %s1169 = sand.u32 %s210, 1
        %s1170 = scalar_lea.vmem [#allocation6], %s1169
        // Predicated region
        $region41: #{tpu_custom_call.1} parent=39 // pred_check
          %p1171 = pneg %p168
        $region42: #{tpu_custom_call.1} parent=39 // pred_check_branch
          %1173 = sbr.rel (%p1171) target = $region44
        $region43: #{tpu_custom_call.1} parent=39 // pred_region
          %1175 = vsyncadd %s1159, 0
          %s1176 = smul.addr %s25, 8
          %s1177 = smul.addr %s1176, 8
          %s1178 = scalar_lea.hbm %s5, %s1177
          %s1179 = sshll.u32 %s1162, 4
          %s1180 = int_to_ptr.vmem [resolvable:$true] %s1179
          %s1181 = sshll.u32 %s1178, 4
          %s1182 = int_to_ptr.hbm [resolvable:$true] %s1181
          %1187 = dma.vmem_to_hbm [thread:$0]  %s1180, 1024, %s1182, %s1159, 128, 128, 8
        $region44: #{tpu_custom_call.1} parent=39 // pred_fallthru
          _
        // Predicated region
        $region45: #{tpu_custom_call.1} parent=39 // pred_check
          %p1188 = pneg %p194
        $region46: #{tpu_custom_call.1} parent=39 // pred_check_branch
          %1190 = sbr.rel (%p1188) target = $region48
        $region47: #{tpu_custom_call.1} parent=39 // pred_region
          %1192 = vsyncadd %s1164, 0
          %s1193 = scalar_lea.hbm %s6, %s25
          %s1195 = sshll.u32 %s1166, 4
          %s1196 = int_to_ptr.vmem [resolvable:$true] %s1195
          %s1197 = sshll.u32 %s1193, 4
          %s1198 = int_to_ptr.hbm [resolvable:$true] %s1197
          %1200 = dma.vmem_to_hbm [thread:$0]  %s1196, 16, %s1198, %s1164
        $region48: #{tpu_custom_call.1} parent=39 // pred_fallthru
          _
        // Predicated region
        $region49: #{tpu_custom_call.1} parent=39 // pred_check
          %p1201 = pneg %p220
        $region50: #{tpu_custom_call.1} parent=39 // pred_check_branch
          %1203 = sbr.rel (%p1201) target = $region52
        $region51: #{tpu_custom_call.1} parent=39 // pred_region
          %1205 = vsyncadd %s1168, 0
          %s1206 = scalar_lea.hbm %s7, %s25
          %s1208 = sshll.u32 %s1170, 4
          %s1209 = int_to_ptr.vmem [resolvable:$true] %s1208
          %s1210 = sshll.u32 %s1206, 4
          %s1211 = int_to_ptr.hbm [resolvable:$true] %s1210
          %1213 = dma.vmem_to_hbm [thread:$0]  %s1209, 16, %s1211, %s1168
        $region52: #{tpu_custom_call.1} parent=39 // pred_fallthru
          _
      $region40: #{tpu_custom_call.1} parent=5 // pred_fallthru
        _
      %p1214 = scmp.le.s32.totalorder 2, %s20
      // Predicated region
      $region53: #{tpu_custom_call.1} parent=5 // pred_check
        %p1215 = pneg %p1214
      $region54: #{tpu_custom_call.1} parent=5 // pred_check_branch
        %1217 = sbr.rel (%p1215) target = $region56
      $region55: #{tpu_custom_call.1} parent=5 // pred_region
        %s1218 = ssub.s32 %s20, 2
        // Predicated region
        $region57: #{tpu_custom_call.1} parent=55 // pred_check
          %p1219 = pneg %p174
        $region58: #{tpu_custom_call.1} parent=55 // pred_check_branch
          %1221 = sbr.rel (%p1219) target = $region60
        $region59: #{tpu_custom_call.1} parent=55 // pred_region
          %s1222 = sand.u32 %s159, 1
          %s1223 = scalar_lea.sflag [#allocation3], %s1222
          %s1224 = sand.u32 %s159, 1
          %s1225 = smul.addr %s1224, 64
          %s1226 = scalar_lea.vmem [#allocation2], %s1225
          %1228 = dma.done %s1223, 1024
        $region60: #{tpu_custom_call.1} parent=55 // pred_fallthru
          _
        // Predicated region
        $region61: #{tpu_custom_call.1} parent=55 // pred_check
          %p1229 = pneg %p200
        $region62: #{tpu_custom_call.1} parent=55 // pred_check_branch
          %1231 = sbr.rel (%p1229) target = $region64
        $region63: #{tpu_custom_call.1} parent=55 // pred_region
          %s1232 = sand.u32 %s26, 1
          %s1233 = scalar_lea.sflag [#allocation5], %s1232
          %s1234 = sand.u32 %s185, 1
          %s1235 = scalar_lea.vmem [#allocation4], %s1234
          %1237 = dma.done %s1233, 16
        $region64: #{tpu_custom_call.1} parent=55 // pred_fallthru
          _
        // Predicated region
        $region65: #{tpu_custom_call.1} parent=55 // pred_check
          %p1238 = pneg %p226
        $region66: #{tpu_custom_call.1} parent=55 // pred_check_branch
          %1240 = sbr.rel (%p1238) target = $region68
        $region67: #{tpu_custom_call.1} parent=55 // pred_region
          %s1241 = sand.u32 %s26, 1
          %s1242 = scalar_lea.sflag [#allocation5], %s1241
          %s1243 = sand.u32 %s211, 1
          %s1244 = scalar_lea.vmem [#allocation6], %s1243
          %1246 = dma.done %s1242, 16
        $region68: #{tpu_custom_call.1} parent=55 // pred_fallthru
          _
      $region56: #{tpu_custom_call.1} parent=5 // pred_fallthru
        _
    $region6: #{tpu_custom_call.1} parent=1 // loop_footer
      %s24 = sadd.s32 1, %s20
    $region7: #{tpu_custom_call.1} parent=1 // loop_footer_branch
      %19 = sbr.rel target = $region3
    $region8: #{tpu_custom_call.1} parent=1 // loop_exit
      _
    %1247 = vsyncpa [#allocation3], 1
    %s1248 = scalar_lea.sflag [#allocation3], 1
    %1249 = vsyncpa %s1248, 1
    %1250 = vsyncpa [#allocation5], 1
    %s1251 = scalar_lea.sflag [#allocation5], 1
    %1252 = vsyncpa %s1251, 1

</llo_original>
